<compile_context>
chip_gen: v6e
topology: v6e:2x2x1
jax: 0.10.0
libtpu: 0.0.40
codegen_flags: <defaults>
</compile_context>

<pallas_src>
import functools

import numpy as np
import jax
import jax.numpy as jnp
from jax.experimental import pallas as pl
from jax.experimental.pallas import tpu as pltpu


_MAXN_UNROLL_LIMIT = 32  # static-unroll the per-node loop below this size


def _graph_encoder_kernel(idx_ref, inv_ref, emb_ref, out_ref, *, sub_rows):
    TB, MAXN = idx_ref.shape
    Np = emb_ref.shape[0]

    # Node ids along the lane axis; (1, Np) + broadcasting in the compare keeps
    # ~1 vreg live instead of a full [TB, Np] iota.
    node_ids = jax.lax.broadcasted_iota(jnp.int32, (1, Np), 1)

    emb = emb_ref[...]                                # resident [Np, Dp] table

    # Sub-tile the batch rows so the counts accumulator + temporaries stay
    # bounded in vregs; each sub-tile ends with its own MXU dot + store.
    for row0 in range(0, TB, sub_rows):
        rows = min(sub_rows, TB - row0)
        idx = idx_ref[pl.ds(row0, rows), :]           # [rows, MAXN], pad = -1
        counts = jnp.zeros((rows, Np), jnp.float32)

        if MAXN <= _MAXN_UNROLL_LIMIT:
            # Small static trip count: constant column slices, fully unrolled.
            for m in range(MAXN):
                counts = counts + (idx[:, m:m + 1] == node_ids).astype(jnp.float32)
        else:
            # Large MAXN: bounded code size / live ranges; read one index
            # column per step straight from the VMEM ref.
            def add_one(m, c):
                col = idx_ref[pl.ds(row0, rows), pl.ds(m, 1)]     # [rows, 1]
                return c + (col == node_ids).astype(jnp.float32)
            counts = jax.lax.fori_loop(0, MAXN, add_one, counts, unroll=4)

        # Gather-by-matmul on the MXU.  counts holds exact small integers, so
        # the cast to the table dtype (bf16 path) is lossless; accumulate f32.
        acc = jnp.dot(counts.astype(emb.dtype), emb,
                      preferred_element_type=jnp.float32)          # [rows, Dp]

        # Epilogue: fold 1/len (padded batch rows have inv = 0 -> exact zeros).
        inv = inv_ref[pl.ds(row0, rows), :]                        # [rows, 1]
        out_ref[pl.ds(row0, rows), :] = (acc * inv).astype(out_ref.dtype)


def _round_up(x, m):
    return ((x + m - 1) // m) * m


def graph_encoder(indices, inv_len, emb_table, *, tb=None, sub_rows=None,
                  use_bf16=False):
    """indices: [B, MAXN] int32 (pad -1); inv_len: [B, 1] f32 (1/graph_len);
    emb_table: [NODE_NUM, EMB_DIM] f32  ->  [B, EMB_DIM] f32."""
    B, MAXN = indices.shape
    N, D = emb_table.shape

    # Host-side alignment: lane-dense output columns (D -> x128) and sublane-
    # aligned table rows (N -> x8).  Padded rows are zero and never selected.
    Np, Dp = _round_up(N, 8), _round_up(D, 128)
    if (Np, Dp) != (N, D):
        emb_table = jnp.pad(emb_table, ((0, Np - N), (0, Dp - D)))
    if use_bf16:
        emb_table = emb_table.astype(jnp.bfloat16)  # MXU-native, halves VMEM/HBM

    if tb is None:
        # Big tiles amortize the ~0.35us/step pipeline overhead and fill the
        # MXU M panel, but keep >= 2 grid steps whenever possible so the
        # "parallel" batch axis splits across both v7x TensorCores.
        tb = min(256, max(8, _round_up((B + 1) // 2, 8)))
    assert tb % 8 == 0, "batch tile must be a multiple of 8 sublanes"
    if sub_rows is None:
        sub_rows = min(128, tb)
    assert sub_rows % 8 == 0

    Bp = _round_up(B, tb)
    if Bp != B:
        pad = Bp - B
        indices = jnp.pad(indices, ((0, pad), (0, 0)), constant_values=-1)
        inv_len = jnp.pad(inv_len, ((0, pad), (0, 0)))             # inv = 0

    grid = (Bp // tb,)

    # Explicit VMEM budget: table (worst-case double-buffered) + i/o tiles,
    # capped at 48 MiB so the same budget also fits v7x's 64 MiB/TC.
    elt = emb_table.dtype.itemsize
    needed = 2 * Np * Dp * elt + 2 * tb * (MAXN * 4 + 4 + Dp * 4)
    vmem_limit = int(min(48 * 2 ** 20, max(32 * 2 ** 20, 2 * needed)))

    kernel = functools.partial(_graph_encoder_kernel, sub_rows=sub_rows)

    out = pl.pallas_call(
        kernel,
        out_shape=jax.ShapeDtypeStruct((Bp, Dp), jnp.float32),
        grid_spec=pltpu.PrefetchScalarGridSpec(
            num_scalar_prefetch=0,
            grid=grid,
            in_specs=[
                pl.BlockSpec((tb, MAXN), lambda i: (i, 0)),        # idx tile
                pl.BlockSpec((tb, 1), lambda i: (i, 0)),           # 1/len tile
                pl.BlockSpec((Np, Dp), lambda i: (0, 0)),          # table (resident)
            ],
            out_specs=pl.BlockSpec((tb, Dp), lambda i: (i, 0)),
        ),
        compiler_params=pltpu.CompilerParams(
            dimension_semantics=("parallel",),                     # megacore split
            vmem_limit_bytes=vmem_limit,
        ),
        cost_estimate=pl.CostEstimate(
            flops=2 * Bp * Np * Dp,
            bytes_accessed=Np * Dp * elt + Bp * MAXN * 4 + Bp * 4 + Bp * Dp * 4,
            transcendentals=0,
        ),
    )(indices, inv_len, emb_table)
    return out[:B, :D]


def pack_graphs(data, max_nodes, node_num):
    """Pad the ragged list-of-node-id-lists into [B, max_nodes] (pad id -1) and
    precompute 1/len per graph.  Enforces the PyTorch-module preconditions."""
    B = len(data)
    idx = np.full((B, max_nodes), -1, dtype=np.int32)
    inv = np.zeros((B, 1), dtype=np.float32)
    for i, g in enumerate(data):
        assert len(g) > 0, "empty graph: torch.mean over zero nodes is undefined"
        assert len(g) <= max_nodes, "graph longer than MAX_NODES"
        assert all(0 <= n < node_num for n in g), "node id out of range"
        idx[i, :len(g)] = g
        inv[i, 0] = 1.0 / float(len(g))
    return idx, inv


if __name__ == "__main__":
    key = jax.random.PRNGKey(0)

    NODE_NUM = 128   # node_num
    EMB_DIM = 128    # emb_dim
    MAX_NODES = 8

    # Deterministic "nn.Embedding" weight.
    emb_table = jax.random.normal(key, (NODE_NUM, EMB_DIM), dtype=jnp.float32)

    # Synthetic `data`: list of graphs, each a variable-length list of node ids
    # (mirrors the list-of-LongTensor input of the PyTorch forward).
    data = [
        [0, 5, 7],
        [1, 2],
        [3, 3, 9, 10, 11],
        [12],
        [4, 6, 8, 100],
        [20, 21],
        [30, 31, 32],
        [127, 0],
        [64, 65, 66, 67, 68, 69],
        [7, 7, 7, 7],
    ]
    idx_np, inv_np = pack_graphs(data, MAX_NODES, NODE_NUM)
    idx, inv_len = jnp.asarray(idx_np), jnp.asarray(inv_np)

    # Pure-numpy reference of the PyTorch forward.
    emb_f32 = np.asarray(emb_table)
    ref = np.stack([emb_f32[np.asarray(g)].mean(axis=0) for g in data], axis=0)

    # 1) f32 path, auto tiling: B=10 -> tb=8 -> 2 grid steps (exercises the
    #    >=2-step megacore heuristic and batch padding).
    out = jax.block_until_ready(graph_encoder(idx, inv_len, emb_table))
    assert out.shape == (len(data), EMB_DIM)
    assert np.allclose(np.asarray(out), ref, atol=1e-5, rtol=1e-5)

    # 2) bf16-table MXU path + multi-sub-tile counts build (tb=16, sub_rows=8).
    #    Compared against a reference built from the bf16-rounded table.
    out_bf = jax.block_until_ready(
        graph_encoder(idx, inv_len, emb_table, tb=16, sub_rows=8, use_bf16=True))
    emb_bf = np.asarray(emb_table.astype(jnp.bfloat16).astype(jnp.float32))
    ref_bf = np.stack([emb_bf[np.asarray(g)].mean(axis=0) for g in data], axis=0)
    assert np.allclose(np.asarray(out_bf), ref_bf, atol=1e-4, rtol=1e-4)

    print("KERNEL_OK")
</pallas_src>

<mosaic_0001>
module attributes {stable_mosaic.version = 11 : i64} {
  func.func @_graph_encoder_kernel(%arg0: i32, %arg1: memref<8x8xi32, #tpu.memory_space<vmem>>, %arg2: memref<8x1xf32, #tpu.memory_space<vmem>>, %arg3: memref<128x128xf32, #tpu.memory_space<vmem>>, %arg4: memref<8x128xf32, #tpu.memory_space<vmem>>) attributes {dimension_semantics = [#tpu.dimension_semantics<parallel>], iteration_bounds = array<i64: 2>, scalar_prefetch = 0 : i64, scratch_operands = 0 : i64, tpu.core_type = #tpu.core_type<tc>, window_params = [{transform_indices = @transform_0, window_bounds = array<i64: 8, 8>}, {transform_indices = @transform_1, window_bounds = array<i64: 8, 1>}, {pipeline_mode = #tpu.pipeline_mode<synchronous>, transform_indices = @transform_2, window_bounds = array<i64: 128, 128>}, {transform_indices = @transform_3, window_bounds = array<i64: 8, 128>}]} {
    %0 = tpu.iota {dimensions = array<i32: 1>} : vector<1x128xi32>
    %c0 = arith.constant 0 : index
    %c0_0 = arith.constant 0 : index
    %1 = vector.load %arg3[%c0, %c0_0] : memref<128x128xf32, #tpu.memory_space<vmem>>, vector<128x128xf32>
    %c0_1 = arith.constant 0 : index
    %c0_2 = arith.constant 0 : index
    %2 = vector.load %arg1[%c0_1, %c0_2] : memref<8x8xi32, #tpu.memory_space<vmem>>, vector<8x8xi32>
    %cst = arith.constant 0.000000e+00 : f32
    %3 = vector.broadcast %cst : f32 to vector<8x128xf32>
    %4 = vector.extract_strided_slice %2 {offsets = [0, 0], sizes = [8, 1], strides = [1, 1]} : vector<8x8xi32> to vector<8x1xi32>
    %5 = vector.broadcast %4 : vector<8x1xi32> to vector<8x128xi32>
    %6 = vector.broadcast %0 : vector<1x128xi32> to vector<8x128xi32>
    %7 = arith.cmpi eq, %5, %6 : vector<8x128xi32>
    %8 = arith.extui %7 : vector<8x128xi1> to vector<8x128xi32>
    %9 = arith.sitofp %8 : vector<8x128xi32> to vector<8x128xf32>
    %10 = arith.addf %3, %9 : vector<8x128xf32>
    %11 = vector.extract_strided_slice %2 {offsets = [0, 1], sizes = [8, 1], strides = [1, 1]} : vector<8x8xi32> to vector<8x1xi32>
    %12 = vector.broadcast %11 : vector<8x1xi32> to vector<8x128xi32>
    %13 = vector.broadcast %0 : vector<1x128xi32> to vector<8x128xi32>
    %14 = arith.cmpi eq, %12, %13 : vector<8x128xi32>
    %15 = arith.extui %14 : vector<8x128xi1> to vector<8x128xi32>
    %16 = arith.sitofp %15 : vector<8x128xi32> to vector<8x128xf32>
    %17 = arith.addf %10, %16 : vector<8x128xf32>
    %18 = vector.extract_strided_slice %2 {offsets = [0, 2], sizes = [8, 1], strides = [1, 1]} : vector<8x8xi32> to vector<8x1xi32>
    %19 = vector.broadcast %18 : vector<8x1xi32> to vector<8x128xi32>
    %20 = vector.broadcast %0 : vector<1x128xi32> to vector<8x128xi32>
    %21 = arith.cmpi eq, %19, %20 : vector<8x128xi32>
    %22 = arith.extui %21 : vector<8x128xi1> to vector<8x128xi32>
    %23 = arith.sitofp %22 : vector<8x128xi32> to vector<8x128xf32>
    %24 = arith.addf %17, %23 : vector<8x128xf32>
    %25 = vector.extract_strided_slice %2 {offsets = [0, 3], sizes = [8, 1], strides = [1, 1]} : vector<8x8xi32> to vector<8x1xi32>
    %26 = vector.broadcast %25 : vector<8x1xi32> to vector<8x128xi32>
    %27 = vector.broadcast %0 : vector<1x128xi32> to vector<8x128xi32>
    %28 = arith.cmpi eq, %26, %27 : vector<8x128xi32>
    %29 = arith.extui %28 : vector<8x128xi1> to vector<8x128xi32>
    %30 = arith.sitofp %29 : vector<8x128xi32> to vector<8x128xf32>
    %31 = arith.addf %24, %30 : vector<8x128xf32>
    %32 = vector.extract_strided_slice %2 {offsets = [0, 4], sizes = [8, 1], strides = [1, 1]} : vector<8x8xi32> to vector<8x1xi32>
    %33 = vector.broadcast %32 : vector<8x1xi32> to vector<8x128xi32>
    %34 = vector.broadcast %0 : vector<1x128xi32> to vector<8x128xi32>
    %35 = arith.cmpi eq, %33, %34 : vector<8x128xi32>
    %36 = arith.extui %35 : vector<8x128xi1> to vector<8x128xi32>
    %37 = arith.sitofp %36 : vector<8x128xi32> to vector<8x128xf32>
    %38 = arith.addf %31, %37 : vector<8x128xf32>
    %39 = vector.extract_strided_slice %2 {offsets = [0, 5], sizes = [8, 1], strides = [1, 1]} : vector<8x8xi32> to vector<8x1xi32>
    %40 = vector.broadcast %39 : vector<8x1xi32> to vector<8x128xi32>
    %41 = vector.broadcast %0 : vector<1x128xi32> to vector<8x128xi32>
    %42 = arith.cmpi eq, %40, %41 : vector<8x128xi32>
    %43 = arith.extui %42 : vector<8x128xi1> to vector<8x128xi32>
    %44 = arith.sitofp %43 : vector<8x128xi32> to vector<8x128xf32>
    %45 = arith.addf %38, %44 : vector<8x128xf32>
    %46 = vector.extract_strided_slice %2 {offsets = [0, 6], sizes = [8, 1], strides = [1, 1]} : vector<8x8xi32> to vector<8x1xi32>
    %47 = vector.broadcast %46 : vector<8x1xi32> to vector<8x128xi32>
    %48 = vector.broadcast %0 : vector<1x128xi32> to vector<8x128xi32>
    %49 = arith.cmpi eq, %47, %48 : vector<8x128xi32>
    %50 = arith.extui %49 : vector<8x128xi1> to vector<8x128xi32>
    %51 = arith.sitofp %50 : vector<8x128xi32> to vector<8x128xf32>
    %52 = arith.addf %45, %51 : vector<8x128xf32>
    %53 = vector.extract_strided_slice %2 {offsets = [0, 7], sizes = [8, 1], strides = [1, 1]} : vector<8x8xi32> to vector<8x1xi32>
    %54 = vector.broadcast %53 : vector<8x1xi32> to vector<8x128xi32>
    %55 = vector.broadcast %0 : vector<1x128xi32> to vector<8x128xi32>
    %56 = arith.cmpi eq, %54, %55 : vector<8x128xi32>
    %57 = arith.extui %56 : vector<8x128xi1> to vector<8x128xi32>
    %58 = arith.sitofp %57 : vector<8x128xi32> to vector<8x128xf32>
    %59 = arith.addf %52, %58 : vector<8x128xf32>
    %cst_3 = arith.constant dense<0.000000e+00> : vector<8x128xf32>
    %60 = tpu.matmul %59, %1, %cst_3 {dimension_numbers = #tpu.dot_dimension_numbers<[1], [0], [0], [1], [0, 0, 1, 1], [], []>} : vector<8x128xf32>, vector<128x128xf32>, vector<8x128xf32> -> vector<8x128xf32>
    %c0_4 = arith.constant 0 : index
    %c0_5 = arith.constant 0 : index
    %61 = vector.load %arg2[%c0_4, %c0_5] : memref<8x1xf32, #tpu.memory_space<vmem>>, vector<8x1xf32>
    %62 = vector.broadcast %61 : vector<8x1xf32> to vector<8x128xf32>
    %63 = arith.mulf %60, %62 : vector<8x128xf32>
    %c0_6 = arith.constant 0 : index
    %c0_7 = arith.constant 0 : index
    %64 = vector.load %arg4[%c0_6, %c0_7] : memref<8x128xf32, #tpu.memory_space<vmem>>, vector<8x128xf32>
    tpu.vector_store %arg4[%c0_6, %c0_7], %63 {strides = array<i32>} : memref<8x128xf32, #tpu.memory_space<vmem>>, vector<8x128xf32>,
    return
  }
  func.func @transform_0(%arg0: i32) -> (i32, i32) {
    %c0_i32 = arith.constant 0 : i32
    %c0_i32_0 = arith.constant 0 : i32
    return %arg0, %c0_i32 : i32, i32
  }
  func.func @transform_1(%arg0: i32) -> (i32, i32) {
    %c0_i32 = arith.constant 0 : i32
    %c0_i32_0 = arith.constant 0 : i32
    return %arg0, %c0_i32 : i32, i32
  }
  func.func @transform_2(%arg0: i32) -> (i32, i32) {
    %c0_i32 = arith.constant 0 : i32
    %c0_i32_0 = arith.constant 0 : i32
    %c0_i32_1 = arith.constant 0 : i32
    return %c0_i32, %c0_i32_0 : i32, i32
  }
  func.func @transform_3(%arg0: i32) -> (i32, i32) {
    %c0_i32 = arith.constant 0 : i32
    %c0_i32_0 = arith.constant 0 : i32
    return %arg0, %c0_i32 : i32, i32
  }
}

</mosaic_0001>

<llo_original>
// kernel: tpu_custom_call.1
$region0: #{tpu_custom_call.1}
  #allocation0 [shape = 'u32[]', space=smem, size = 0x4, offset = 0x4, fixed_abs, tag = 'smem constant byte address 0x4 - core index']
  #allocation1 [shape = 'u32[144,128]{1,0:T(1,128)}', space=vmem, size = 0x12000, scoped, tag = 'internal scratch']
  %s0 = inlined_call_operand.vmem [shape: s32[16,8], index: 0, kind: input, shape index: {}]
  %s1 = inlined_call_operand.vmem [shape: f32[16,1], index: 1, kind: input, shape index: {}]
  %s2 = inlined_call_operand.hbm [shape: f32[128,128], index: 2, kind: input, shape index: {}]
  %s3 = inlined_call_operand.hbm [shape: f32[16,128], index: 3, kind: output, shape index: {}]
  %s4 = sld [smem:[#allocation0]]
  $region49: #{tpu_custom_call.1} parent=0
    _
  %s6 = ssub.s32 1, %s4
  %s7 = scalar_select 0, %s6, %s4
  $region1: #{tpu_custom_call.1} parent=0
    #allocation2 [shape = 'u8[65536]{0}', space=vmem, size = 0x10000, scoped, tag = 'input window, operand 2, single buffered']
    #allocation3 [shape = 's32[2]{0}', space=sflag, size = 0x8, scoped, tag = 'scoped memory for tpu_custom_call.1']
    #allocation4 [shape = 's32[2]{0}', space=sflag, size = 0x8, scoped, tag = 'scoped memory for tpu_custom_call.1']
    #allocation5 [shape = 'u8[8192]{0}', space=vmem, size = 0x2000, scoped, tag = 'output window, operand 0']
    %8 = vsyncpa [#allocation3], 0
    %9 = vsyncpa [#allocation4], 0
    %s10 = scalar_lea.sflag [#allocation4], 1
    %11 = vsyncpa %s10, 0
    loop: start=0, step=1, limit=4
    $region2: #{tpu_custom_call.1} parent=1 // loop_pre_header
      _
    $region3: #{tpu_custom_call.1} parent=1 // loop_header
      %s13 = sphi 0, %s17
      %p14 = scmp.ge.s32.totalorder %s13, 4
      %s23 = sphi 0, %s25
      %s26 = sphi 0, %s23
      %s27 = sphi 0, %s26
      %s43 = sphi 0, %s27
      %s49 = sphi 0, %s51
      %s52 = sphi 0, %s49
      %s53 = sphi 0, %s52
      %s69 = sphi 0, %s53
      %s73 = sphi 0, %s73
      %s75 = sphi 0, %s73
      %s76 = sphi 0, %s75
      %s90 = sphi 0, %s76
      %s96 = sphi 0, %s98
      %s99 = sphi 0, %s96
      %s100 = sphi 0, %s99
      %s116 = sphi 0, %s100
    $region4: #{tpu_custom_call.1} parent=1 // loop_header_branch
      %16 = sbr.rel (%p14) target = $region8
    $region5: #{tpu_custom_call.1} parent=1 // loop_body
      %s18 = ssub.s32 %s13, 1
      %s19 = ssub.s32 %s13, 2
      %s20 = sadd.s32 %s13, 1
      %s21 = ssub.s32 %s13, %s20
      %p22 = scmp.eq.s32.totalorder %s21, 0
      %s24 = sadd.s32 %s23, 1
      %s25 = scalar_select %p22, %s23, %s24
      %p28 = pneg %p22
      %p29 = scmp.eq.s32.totalorder %s13, 1
      %p30 = por %p28, %p29
      %p31 = scmp.ne.s32.totalorder %s23, %s26
      %p32 = scmp.eq.s32.totalorder %s13, 0
      %p33 = por %p31, %p32
      %p34 = scmp.ne.s32.totalorder %s23, %s26
      %p35 = scmp.eq.s32.totalorder %s18, 1
      %p36 = por %p34, %p35
      %p37 = scmp.ne.s32.totalorder %s26, %s27
      %p38 = scmp.eq.s32.totalorder %s18, 0
      %p39 = por %p37, %p38
      %p40 = scmp.ne.s32.totalorder %s26, %s27
      %p41 = scmp.eq.s32.totalorder %s19, 1
      %p42 = por %p40, %p41
      %p44 = scmp.ne.s32.totalorder %s27, %s43
      %p45 = scmp.eq.s32.totalorder %s19, 0
      %p46 = por %p44, %p45
      %s47 = ssub.s32 %s13, %s20
      %p48 = scmp.eq.s32.totalorder %s47, 0
      %s50 = sadd.s32 %s49, 1
      %s51 = scalar_select %p48, %s49, %s50
      %p54 = pneg %p48
      %p55 = scmp.eq.s32.totalorder %s13, 1
      %p56 = por %p54, %p55
      %p57 = scmp.ne.s32.totalorder %s49, %s52
      %p58 = scmp.eq.s32.totalorder %s13, 0
      %p59 = por %p57, %p58
      %p60 = scmp.ne.s32.totalorder %s49, %s52
      %p61 = scmp.eq.s32.totalorder %s18, 1
      %p62 = por %p60, %p61
      %p63 = scmp.ne.s32.totalorder %s52, %s53
      %p64 = scmp.eq.s32.totalorder %s18, 0
      %p65 = por %p63, %p64
      %p66 = scmp.ne.s32.totalorder %s52, %s53
      %p67 = scmp.eq.s32.totalorder %s19, 1
      %p68 = por %p66, %p67
      %p70 = scmp.ne.s32.totalorder %s53, %s69
      %p71 = scmp.eq.s32.totalorder %s19, 0
      %p72 = por %p70, %p71
      %s74 = sadd.s32 %s73, 1
      %p77 = scmp.eq.s32.totalorder %s13, 1
      %p78 = scmp.ne.s32.totalorder %s73, %s75
      %p79 = scmp.eq.s32.totalorder %s13, 0
      %p80 = por %p78, %p79
      %p81 = scmp.ne.s32.totalorder %s73, %s75
      %p82 = scmp.eq.s32.totalorder %s18, 1
      %p83 = por %p81, %p82
      %p84 = scmp.ne.s32.totalorder %s75, %s76
      %p85 = scmp.eq.s32.totalorder %s18, 0
      %p86 = por %p84, %p85
      %p87 = scmp.ne.s32.totalorder %s75, %s76
      %p88 = scmp.eq.s32.totalorder %s19, 1
      %p89 = por %p87, %p88
      %p91 = scmp.ne.s32.totalorder %s76, %s90
      %p92 = scmp.eq.s32.totalorder %s19, 0
      %p93 = por %p91, %p92
      %s94 = ssub.s32 %s13, %s20
      %p95 = scmp.eq.s32.totalorder %s94, 0
      %s97 = sadd.s32 %s96, 1
      %s98 = scalar_select %p95, %s96, %s97
      %p101 = pneg %p95
      %p102 = scmp.eq.s32.totalorder %s13, 1
      %p103 = por %p101, %p102
      %p104 = scmp.ne.s32.totalorder %s96, %s99
      %p105 = scmp.eq.s32.totalorder %s13, 0
      %p106 = por %p104, %p105
      %p107 = scmp.ne.s32.totalorder %s96, %s99
      %p108 = scmp.eq.s32.totalorder %s18, 1
      %p109 = por %p107, %p108
      %p110 = scmp.ne.s32.totalorder %s99, %s100
      %p111 = scmp.eq.s32.totalorder %s18, 0
      %p112 = por %p110, %p111
      %p113 = scmp.ne.s32.totalorder %s99, %s100
      %p114 = scmp.eq.s32.totalorder %s19, 1
      %p115 = por %p113, %p114
      %p117 = scmp.ne.s32.totalorder %s100, %s116
      %p118 = scmp.eq.s32.totalorder %s19, 0
      %p119 = por %p117, %p118
      %p120 = scmp.le.s32.totalorder 1, %s13
      %p121 = scmp.lt.s32.totalorder %s13, 3
      %p122 = pnand %p120, %p121
      %p123 = pneg %p122
      // Predicated region
      $region9: #{tpu_custom_call.1} parent=5 // pred_check
        _
      $region10: #{tpu_custom_call.1} parent=5 // pred_check_branch
        %125 = sbr.rel (%p122) target = $region12
      $region11: #{tpu_custom_call.1} parent=5 // pred_region
        %s126 = ssub.s32 %s13, 1
        // Predicated region
        $region13: #{tpu_custom_call.1} parent=11 // pred_check
          %p127 = pneg %p86
        $region14: #{tpu_custom_call.1} parent=11 // pred_check_branch
          %129 = sbr.rel (%p127) target = $region16
        $region15: #{tpu_custom_call.1} parent=11 // pred_region
          %s131 = ssub.s32 2048, 2048
          %132 = vsyncadd [#allocation3], %s131
          %s133 = sshll.u32 [#allocation2], 4
          %s134 = int_to_ptr.vmem [resolvable:$true] %s133
          %139 = dma.hbm_to_vmem [thread:$0]  %s2, 2048, %s134, [#allocation3], 128, 128, 8
        $region16: #{tpu_custom_call.1} parent=11 // pred_fallthru
          _
      $region12: #{tpu_custom_call.1} parent=5 // pred_fallthru
        _
      %p140 = scmp.lt.s32.totalorder %s13, 2
      // Predicated region
      $region17: #{tpu_custom_call.1} parent=5 // pred_check
        %p141 = pneg %p140
      $region18: #{tpu_custom_call.1} parent=5 // pred_check_branch
        %143 = sbr.rel (%p141) target = $region20
      $region19: #{tpu_custom_call.1} parent=5 // pred_region
        // Predicated region
        $region21: #{tpu_custom_call.1} parent=19 // pred_check
          %p144 = pneg %p33
        $region22: #{tpu_custom_call.1} parent=19 // pred_check_branch
          %146 = sbr.rel (%p144) target = $region24
        $region23: #{tpu_custom_call.1} parent=19 // pred_region
          %p147 = scmp.lt.s32.totalorder %s13, 1
          %s148 = scalar_select %p147, %s13, 1
          %s149 = smul.addr %s148, 8
          %s150 = scalar_lea.vmem %s0, %s149
        $region24: #{tpu_custom_call.1} parent=19 // pred_fallthru
          _
        // Predicated region
        $region25: #{tpu_custom_call.1} parent=19 // pred_check
          %p151 = pneg %p59
        $region26: #{tpu_custom_call.1} parent=19 // pred_check_branch
          %153 = sbr.rel (%p151) target = $region28
        $region27: #{tpu_custom_call.1} parent=19 // pred_region
          %p154 = scmp.lt.s32.totalorder %s13, 1
          %s155 = scalar_select %p154, %s13, 1
          %s156 = smul.addr %s155, 8
          %s157 = scalar_lea.vmem %s1, %s156
        $region28: #{tpu_custom_call.1} parent=19 // pred_fallthru
          _
      $region20: #{tpu_custom_call.1} parent=5 // pred_fallthru
        _
      %p158 = scmp.le.s32.totalorder 1, %s13
      %p159 = scmp.lt.s32.totalorder %s13, 3
      %p160 = pnand %p158, %p159
      %p161 = pneg %p160
      // Predicated region
      $region29: #{tpu_custom_call.1} parent=5 // pred_check
        _
      $region30: #{tpu_custom_call.1} parent=5 // pred_check_branch
        %163 = sbr.rel (%p160) target = $region32
      $region31: #{tpu_custom_call.1} parent=5 // pred_region
        %s164 = ssub.s32 %s13, 1
        // Predicated region
        $region33: #{tpu_custom_call.1} parent=31 // pred_check
          %p165 = pneg %p86
        $region34: #{tpu_custom_call.1} parent=31 // pred_check_branch
          %167 = sbr.rel (%p165) target = $region36
        $region35: #{tpu_custom_call.1} parent=31 // pred_region
          %168 = dma.done [#allocation3], 2048
        $region36: #{tpu_custom_call.1} parent=31 // pred_fallthru
          _
        %p169 = scmp.lt.s32.totalorder %s18, 1
        %s170 = scalar_select %p169, %s18, 1
        %s171 = smul.addr %s170, 8
        %s172 = scalar_lea.vmem %s0, %s171
        %p173 = pneg %p39
        %p174 = pneg %p36
        %p175 = scmp.lt.s32.totalorder %s18, 1
        %s176 = scalar_select %p175, %s18, 1
        %s177 = smul.addr %s176, 8
        %s178 = scalar_lea.vmem %s1, %s177
        %p179 = pneg %p65
        %p180 = pneg %p62
        %p181 = pneg %p86
        %p182 = pneg %p83
        %p183 = pneg %p112
        %p184 = pneg %p109
        %s185 = sand.u32 %s99, 1
        %s186 = scalar_lea.sflag [#allocation4], %s185
        %s187 = sand.u32 %s99, 1
        %s188 = smul.addr %s187, 8
        %s189 = scalar_lea.vmem [#allocation5], %s188
        %p190 = scmp.lt.s32.totalorder %s18, 1
        %s191 = scalar_select %p190, %s18, 1
        %s192 = smul.addr %s191, 8
        %s193 = scalar_lea.vmem %s0, %s192
        %p194 = scmp.lt.s32.totalorder %s18, 1
        %s195 = scalar_select %p194, %s18, 1
        %s196 = smul.addr %s195, 8
        %s197 = scalar_lea.vmem %s1, %s196
        %v198 = vlaneseq
        %v199 = vand.u32 %v198, 127
        %v200 = vld [vmem:[#allocation2] sm:$0xff]
        %v201 = vld [vmem:[#allocation2 + $0x8] sm:$0xff]
        %v202 = vld [vmem:[#allocation2 + $0x10] sm:$0xff]
        %v203 = vld [vmem:[#allocation2 + $0x18] sm:$0xff]
        %v204 = vld [vmem:[#allocation2 + $0x20] sm:$0xff]
        %v205 = vld [vmem:[#allocation2 + $0x28] sm:$0xff]
        %v206 = vld [vmem:[#allocation2 + $0x30] sm:$0xff]
        %v207 = vld [vmem:[#allocation2 + $0x38] sm:$0xff]
        %v208 = vld [vmem:[#allocation2 + $0x40] sm:$0xff]
        %v209 = vld [vmem:[#allocation2 + $0x48] sm:$0xff]
        %v210 = vld [vmem:[#allocation2 + $0x50] sm:$0xff]
        %v211 = vld [vmem:[#allocation2 + $0x58] sm:$0xff]
        %v212 = vld [vmem:[#allocation2 + $0x60] sm:$0xff]
        %v213 = vld [vmem:[#allocation2 + $0x68] sm:$0xff]
        %v214 = vld [vmem:[#allocation2 + $0x70] sm:$0xff]
        %v215 = vld [vmem:[#allocation2 + $0x78] sm:$0xff]
        %v216 = vld [vmem:[%s193] sm:$0xff]
        %217 = vset.pattern.permute.xlu0 0
        %218 = vperm.xlu0 %217, %v216
        %v219 = vpop.permute.xlu0 %218
        %vm220 = vcmp.eq.s32.totalorder %v219, %v199
        %v221 = vsel %vm220, 1, 0
        %v222 = vcvt.s32.f32 %v221
        %v223 = vadd.f32 %v222, 0.0
        %224 = vset.pattern.permute.xlu0 1
        %225 = vperm.xlu0 %224, %v216
        %v226 = vpop.permute.xlu0 %225
        %vm227 = vcmp.eq.s32.totalorder %v226, %v199
        %v228 = vsel %vm227, 1, 0
        %v229 = vcvt.s32.f32 %v228
        %v230 = vadd.f32 %v223, %v229
        %231 = vset.pattern.permute.xlu0 2
        %232 = vperm.xlu0 %231, %v216
        %v233 = vpop.permute.xlu0 %232
        %vm234 = vcmp.eq.s32.totalorder %v233, %v199
        %v235 = vsel %vm234, 1, 0
        %v236 = vcvt.s32.f32 %v235
        %v237 = vadd.f32 %v230, %v236
        %238 = vset.pattern.permute.xlu0 3
        %239 = vperm.xlu0 %238, %v216
        %v240 = vpop.permute.xlu0 %239
        %vm241 = vcmp.eq.s32.totalorder %v240, %v199
        %v242 = vsel %vm241, 1, 0
        %v243 = vcvt.s32.f32 %v242
        %v244 = vadd.f32 %v237, %v243
        %245 = vset.pattern.permute.xlu0 4
        %246 = vperm.xlu0 %245, %v216
        %v247 = vpop.permute.xlu0 %246
        %vm248 = vcmp.eq.s32.totalorder %v247, %v199
        %v249 = vsel %vm248, 1, 0
        %v250 = vcvt.s32.f32 %v249
        %v251 = vadd.f32 %v244, %v250
        %252 = vset.pattern.permute.xlu0 5
        %253 = vperm.xlu0 %252, %v216
        %v254 = vpop.permute.xlu0 %253
        %vm255 = vcmp.eq.s32.totalorder %v254, %v199
        %v256 = vsel %vm255, 1, 0
        %v257 = vcvt.s32.f32 %v256
        %v258 = vadd.f32 %v251, %v257
        %259 = vset.pattern.permute.xlu0 6
        %260 = vperm.xlu0 %259, %v216
        %v261 = vpop.permute.xlu0 %260
        %vm262 = vcmp.eq.s32.totalorder %v261, %v199
        %v263 = vsel %vm262, 1, 0
        %v264 = vcvt.s32.f32 %v263
        %v265 = vadd.f32 %v258, %v264
        %266 = vset.pattern.permute.xlu0 7
        %267 = vperm.xlu0 %266, %v216
        %v268 = vpop.permute.xlu0 %267
        %vm269 = vcmp.eq.s32.totalorder %v268, %v199
        %v270 = vsel %vm269, 1, 0
        %v271 = vcvt.s32.f32 %v270
        %v272 = vadd.f32 %v265, %v271
        %273 = vmatprep.subr.mxu0 0.0
        %274 = vmatpush1.msra.mxu0 %v215
        %275 = vmatprep.subr.mxu0 0.0
        %276 = vmatpush1.msra.mxu0 %v214
        %277 = vmatprep.subr.mxu0 0.0
        %278 = vmatpush1.msra.mxu0 %v213
        %279 = vmatprep.subr.mxu0 0.0
        %280 = vmatpush1.msra.mxu0 %v212
        %281 = vmatprep.subr.mxu0 0.0
        %282 = vmatpush1.msra.mxu0 %v211
        %283 = vmatprep.subr.mxu0 0.0
        %284 = vmatpush1.msra.mxu0 %v210
        %285 = vmatprep.subr.mxu0 0.0
        %286 = vmatpush1.msra.mxu0 %v209
        %287 = vmatprep.subr.mxu0 0.0
        %288 = vmatpush1.msra.mxu0 %v208
        %289 = vmatprep.subr.mxu0 0.0
        %290 = vmatpush1.msra.mxu0 %v207
        %291 = vmatprep.subr.mxu0 0.0
        %292 = vmatpush1.msra.mxu0 %v206
        %293 = vmatprep.subr.mxu0 0.0
        %294 = vmatpush1.msra.mxu0 %v205
        %295 = vmatprep.subr.mxu0 0.0
        %296 = vmatpush1.msra.mxu0 %v204
        %297 = vmatprep.subr.mxu0 0.0
        %298 = vmatpush1.msra.mxu0 %v203
        %299 = vmatprep.subr.mxu0 0.0
        %300 = vmatpush1.msra.mxu0 %v202
        %301 = vmatprep.subr.mxu0 0.0
        %302 = vmatpush1.msra.mxu0 %v201
        %303 = vmatprep.subr.mxu0 0.0
        %304 = vmatpush1.msra.mxu0 %v200
        %305 = vmatprep.subr.mxu0 0.0
        %306 = vmatpush2.msra.mxu0 0.0
        %307 = vmatprep.subr.mxu0 0.0
        %308 = vmatpush2.msra.mxu0 0.0
        %309 = vmatprep.subr.mxu0 0.0
        %310 = vmatpush2.msra.mxu0 0.0
        %311 = vmatprep.subr.mxu0 0.0
        %312 = vmatpush2.msra.mxu0 0.0
        %313 = vmatprep.subr.mxu0 0.0
        %314 = vmatpush2.msra.mxu0 0.0
        %315 = vmatprep.subr.mxu0 0.0
        %316 = vmatpush2.msra.mxu0 0.0
        %317 = vmatprep.subr.mxu0 0.0
        %318 = vmatpush2.msra.mxu0 0.0
        %319 = vmatprep.subr.mxu0 0.0
        %320 = vmatpush2.msra.mxu0 0.0
        %321 = vmatprep.subr.mxu0 0.0
        %322 = vmatpush2.msra.mxu0 0.0
        %323 = vmatprep.subr.mxu0 0.0
        %324 = vmatpush2.msra.mxu0 0.0
        %325 = vmatprep.subr.mxu0 0.0
        %326 = vmatpush2.msra.mxu0 0.0
        %327 = vmatprep.subr.mxu0 0.0
        %328 = vmatpush2.msra.mxu0 0.0
        %329 = vmatprep.subr.mxu0 0.0
        %330 = vmatpush2.msra.mxu0 0.0
        %331 = vmatprep.subr.mxu0 0.0
        %332 = vmatpush2.msra.mxu0 0.0
        %333 = vmatprep.subr.mxu0 0.0
        %334 = vmatpush2.msra.mxu0 0.0
        %335 = vmatprep.subr.mxu0 0.0
        %336 = vmatpush2.msra.mxu0 0.0
        %337 = vmatprep.mubr.f32.mxu0 0.0
        %338 = vmatmul.mubr.f32.gmra.mxu0 %v272
        %v339 = vpop.f32.mrf.mxu0
        %v340 = vadd.f32 0.0, %v339
        %v341 = vpop.f32.mrf.mxu0
        %342 = vdwg.mxu0
        %v343 = vld [vmem:[%s197] sm:$0xff]
        %345 = vset.pattern.permute.xlu0 0
        %346 = vperm.xlu0 %345, %v343
        %v347 = vpop.permute.xlu0 %346
        %v349 = vmul.f32 %v340, %v347
        %350 = vst [vmem:[%s189] sm:$0xff] %v349
        %s351 = sand.u32 %s99, 1
        %s352 = scalar_lea.sflag [#allocation4], %s351
        %s353 = sand.u32 %s99, 1
        %s354 = smul.addr %s353, 8
        %s355 = scalar_lea.vmem [#allocation5], %s354
        // Predicated region
        $region37: #{tpu_custom_call.1} parent=31 // pred_check
          %p356 = pneg %p109
        $region38: #{tpu_custom_call.1} parent=31 // pred_check_branch
          %358 = sbr.rel (%p356) target = $region40
        $region39: #{tpu_custom_call.1} parent=31 // pred_region
          %s360 = ssub.s32 128, 128
          %361 = vsyncadd %s352, %s360
          %s362 = smul.addr %s18, 128
          %s363 = scalar_lea.hbm %s3, %s362
          %s365 = sshll.u32 %s355, 4
          %s366 = int_to_ptr.vmem [resolvable:$true] %s365
          %368 = dma.vmem_to_hbm [thread:$0]  %s366, 128, %s363, %s352
        $region40: #{tpu_custom_call.1} parent=31 // pred_fallthru
          _
      $region32: #{tpu_custom_call.1} parent=5 // pred_fallthru
        _
      %p369 = scmp.le.s32.totalorder 2, %s13
      // Predicated region
      $region41: #{tpu_custom_call.1} parent=5 // pred_check
        %p370 = pneg %p369
      $region42: #{tpu_custom_call.1} parent=5 // pred_check_branch
        %372 = sbr.rel (%p370) target = $region44
      $region43: #{tpu_custom_call.1} parent=5 // pred_region
        %s373 = ssub.s32 %s13, 2
        // Predicated region
        $region45: #{tpu_custom_call.1} parent=43 // pred_check
          %p374 = pneg %p115
        $region46: #{tpu_custom_call.1} parent=43 // pred_check_branch
          %376 = sbr.rel (%p374) target = $region48
        $region47: #{tpu_custom_call.1} parent=43 // pred_region
          %s377 = sand.u32 %s100, 1
          %s378 = scalar_lea.sflag [#allocation4], %s377
          %s379 = sand.u32 %s100, 1
          %s380 = smul.addr %s379, 8
          %s381 = scalar_lea.vmem [#allocation5], %s380
          %382 = dma.done %s378, 128
        $region48: #{tpu_custom_call.1} parent=43 // pred_fallthru
          _
      $region44: #{tpu_custom_call.1} parent=5 // pred_fallthru
        _
    $region6: #{tpu_custom_call.1} parent=1 // loop_footer
      %s17 = sadd.s32 1, %s13
    $region7: #{tpu_custom_call.1} parent=1 // loop_footer_branch
      %12 = sbr.rel target = $region3
    $region8: #{tpu_custom_call.1} parent=1 // loop_exit
      _
    %383 = vsyncpa [#allocation3], 1
    %s384 = scalar_lea.sflag [#allocation3], 1
    %385 = vsyncpa %s384, 1
    %386 = vsyncpa [#allocation4], 1
    %s387 = scalar_lea.sflag [#allocation4], 1
    %388 = vsyncpa %s387, 1

</llo_original>
